<compile_context>
chip_gen: v6e
topology: v6e:2x2x1
jax: 0.10.0
libtpu: 0.0.40
codegen_flags: <defaults>
</compile_context>

<pallas_src>
import functools
import math

import jax
import jax.numpy as jnp
from jax import lax
from jax.experimental import pallas as pl
from jax.experimental.pallas import tpu as pltpu


def _pa_loss_kernel(x_ref, p_ref, t_ref,
                    pos_ref, neg_ref, seen_ref,
                    p_sim, n_sim, cnt, pn_sc,
                    *, alpha, mrg):
    i = pl.program_id(1)                       # batch (reduction) grid index
    last = pl.num_programs(1) - 1

    @pl.when(i == 0)
    def _init():
        p_sim[...] = jnp.zeros_like(p_sim)
        n_sim[...] = jnp.zeros_like(n_sim)
        cnt[...] = jnp.zeros_like(cnt)
        # Normalize this class block's proxies once per class block and cache
        # the bf16 MXU operand in scratch (rsqrt + mul, no divide).
        p = p_ref[...].astype(jnp.float32)
        p_inv = lax.rsqrt(jnp.maximum(jnp.sum(p * p, axis=-1, keepdims=True), 1e-24))
        pn_sc[...] = (p * p_inv).astype(pn_sc.dtype)

    # L2-normalize the embedding tile (F.normalize semantics, eps = 1e-12).
    x = x_ref[...].astype(jnp.float32)
    x_inv = lax.rsqrt(jnp.maximum(jnp.sum(x * x, axis=-1, keepdims=True), 1e-24))
    xn = (x * x_inv).astype(jnp.bfloat16)

    # Cosine similarities on the MXU: contract the last dim of BOTH operands
    # (no explicit proxy transpose), bf16 in, f32 accumulate.
    cos = lax.dot_general(
        xn, pn_sc[...],
        dimension_numbers=(((1,), (1,)), ((), ())),
        preferred_element_type=jnp.float32)                      # (TN, TC)

    tn, tc = cos.shape
    cls_ids = pl.program_id(0) * tc + lax.broadcasted_iota(jnp.int32, (tn, tc), 1)
    one_hot = (cls_ids == t_ref[...]).astype(jnp.float32)        # (TN, TC)

    # Single full-size transcendental; exp(alpha*mrg) is applied at finalize.
    e = jnp.exp(alpha * cos)
    n_sim[...] += jnp.sum((1.0 - one_hot) * e, axis=0, keepdims=True)

    # Positive path: gather each row's positive cosine, exponentiate only TN
    # values (instead of a second (TN, TC) exp), then scatter via the one-hot.
    cos_pos = jnp.sum(one_hot * cos, axis=1, keepdims=True)      # (TN, 1)
    pos_e = jnp.exp(-alpha * (cos_pos - mrg))                    # (TN, 1)
    p_sim[...] += jnp.sum(one_hot * pos_e, axis=0, keepdims=True)
    cnt[...] += jnp.sum(one_hot, axis=0, keepdims=True)

    @pl.when(i == last)
    def _finalize():
        k_neg = math.exp(alpha * mrg)
        pos_ref[...] = jnp.log1p(p_sim[...])
        neg_ref[...] = jnp.log1p(k_neg * n_sim[...])
        seen_ref[...] = (cnt[...] > 0.0).astype(jnp.float32)


def _pick_tile(dim, target):
    t = min(dim, target)
    return t if dim % t == 0 else dim


def pa_loss_angle(x, t, proxies, *, mrg=0.1, alpha=32.0, tile_n=256, tile_c=512):
    """Proxy-Anchor loss. x: (N, D) float, t: (N,) int labels, proxies: (C, D)."""
    n, d = x.shape
    c = proxies.shape[0]
    tn = _pick_tile(n, tile_n)          # batch tile (reduction axis)
    tc = _pick_tile(c, tile_c)          # class tile (lane-dense, parallel axis)
    t2 = t.reshape(n, 1).astype(jnp.int32)

    kernel = functools.partial(_pa_loss_kernel, alpha=float(alpha), mrg=float(mrg))
    per_class = jax.ShapeDtypeStruct((1, c), jnp.float32)

    pos_log, neg_log, seen = pl.pallas_call(
        kernel,
        out_shape=(per_class, per_class, per_class),
        grid_spec=pltpu.PrefetchScalarGridSpec(
            num_scalar_prefetch=0,
            grid=(c // tc, n // tn),
            in_specs=[
                pl.BlockSpec((tn, d), lambda j, i: (i, 0)),   # embeddings tile
                pl.BlockSpec((tc, d), lambda j, i: (j, 0)),   # proxy tile
                pl.BlockSpec((tn, 1), lambda j, i: (i, 0)),   # labels tile
            ],
            out_specs=(
                pl.BlockSpec((1, tc), lambda j, i: (0, j)),   # log1p(P_sim_sum)
                pl.BlockSpec((1, tc), lambda j, i: (0, j)),   # log1p(N_sim_sum)
                pl.BlockSpec((1, tc), lambda j, i: (0, j)),   # class-seen mask
            ),
            scratch_shapes=[
                pltpu.VMEM((1, tc), jnp.float32),    # p_sim accumulator
                pltpu.VMEM((1, tc), jnp.float32),    # n_sim accumulator
                pltpu.VMEM((1, tc), jnp.float32),    # positive-count accumulator
                pltpu.VMEM((tc, d), jnp.bfloat16),   # normalized proxy cache
            ],
        ),
        compiler_params=pltpu.CompilerParams(
            dimension_semantics=("parallel", "arbitrary"),
            vmem_limit_bytes=32 * 1024 * 1024,
        ),
    )(x, proxies, t2)

    # Tiny O(C) final reduction in plain JAX (matches torch nonzero/num_valid).
    num_valid = jnp.sum(seen)
    pos_term = jnp.sum(pos_log) / num_valid
    neg_term = jnp.sum(neg_log) / float(c)
    return pos_term + neg_term


if __name__ == "__main__":
    nb_classes = 16
    sz_embed = 32
    batch = 8

    key = jax.random.PRNGKey(0)
    kx, kt, kp = jax.random.split(key, 3)

    x = jax.random.normal(kx, (batch, sz_embed), dtype=jnp.float32)
    t = jax.random.randint(kt, (batch,), 0, nb_classes, dtype=jnp.int32)
    # proxies ~ kaiming_normal_(mode='fan_out'): std = sqrt(2 / nb_classes)
    proxies = jax.random.normal(kp, (nb_classes, sz_embed), dtype=jnp.float32) * \
        jnp.sqrt(2.0 / nb_classes)

    loss = pa_loss_angle(x, t, proxies, mrg=0.1, alpha=32.0)
    jax.block_until_ready(loss)

    # Pure-JAX f32 reference. The kernel uses bf16 MXU operands (f32 accumulate),
    # so the check uses a correspondingly relaxed tolerance.
    xn = x / jnp.maximum(jnp.linalg.norm(x, axis=-1, keepdims=True), 1e-12)
    pn = proxies / jnp.maximum(jnp.linalg.norm(proxies, axis=-1, keepdims=True), 1e-12)
    cos = xn @ pn.T
    oh = jax.nn.one_hot(t, nb_classes, dtype=jnp.float32)
    pos_exp = jnp.exp(-32.0 * (cos - 0.1))
    neg_exp = jnp.exp(32.0 * (cos + 0.1))
    p_sum = jnp.sum(oh * pos_exp, axis=0)
    n_sum = jnp.sum((1.0 - oh) * neg_exp, axis=0)
    nv = jnp.sum((jnp.sum(oh, axis=0) > 0).astype(jnp.float32))
    ref = jnp.sum(jnp.log1p(p_sum)) / nv + jnp.sum(jnp.log1p(n_sum)) / nb_classes
    assert jnp.allclose(loss, ref, rtol=2e-2, atol=2e-2), (loss, ref)

    print("KERNEL_OK")
</pallas_src>

<mosaic_0001>
module attributes {stable_mosaic.version = 11 : i64} {
  func.func @_pa_loss_kernel(%arg0: i32, %arg1: i32, %arg2: memref<8x32xf32, #tpu.memory_space<vmem>>, %arg3: memref<16x32xf32, #tpu.memory_space<vmem>>, %arg4: memref<8x1xi32, #tpu.memory_space<vmem>>, %arg5: memref<1x16xf32, #tpu.memory_space<vmem>>, %arg6: memref<1x16xf32, #tpu.memory_space<vmem>>, %arg7: memref<1x16xf32, #tpu.memory_space<vmem>>, %arg8: memref<1x16xf32, #tpu.memory_space<vmem>>, %arg9: memref<1x16xf32, #tpu.memory_space<vmem>>, %arg10: memref<1x16xf32, #tpu.memory_space<vmem>>, %arg11: memref<16x32xbf16, #tpu.memory_space<vmem>>) attributes {dimension_semantics = [#tpu.dimension_semantics<parallel>, #tpu.dimension_semantics<arbitrary>], iteration_bounds = array<i64: 1, 1>, scalar_prefetch = 0 : i64, scratch_operands = 4 : i64, tpu.core_type = #tpu.core_type<tc>, window_params = [{transform_indices = @transform_0, window_bounds = array<i64: 8, 32>}, {transform_indices = @transform_1, window_bounds = array<i64: 16, 32>}, {transform_indices = @transform_2, window_bounds = array<i64: 8, 1>}, {transform_indices = @transform_3, window_bounds = array<i64: 1, 16>}, {transform_indices = @transform_4, window_bounds = array<i64: 1, 16>}, {transform_indices = @transform_5, window_bounds = array<i64: 1, 16>}]} {
    %c0_i32 = arith.constant 0 : i32
    %0 = arith.cmpi eq, %arg1, %c0_i32 : i32
    %1 = arith.extui %0 : i1 to i32
    %c0_i32_0 = arith.constant 0 : i32
    %2 = arith.cmpi ne, %1, %c0_i32_0 : i32
    scf.if %2 {
      %cst_30 = arith.constant 0.000000e+00 : f32
      %58 = vector.broadcast %cst_30 : f32 to vector<1x16xf32>
      %c0_31 = arith.constant 0 : index
      %c0_32 = arith.constant 0 : index
      %59 = vector.load %arg8[%c0_31, %c0_32] : memref<1x16xf32, #tpu.memory_space<vmem>>, vector<1x16xf32>
      tpu.vector_store %arg8[%c0_31, %c0_32], %58 {strides = array<i32>} : memref<1x16xf32, #tpu.memory_space<vmem>>, vector<1x16xf32>,
      %cst_33 = arith.constant 0.000000e+00 : f32
      %60 = vector.broadcast %cst_33 : f32 to vector<1x16xf32>
      %c0_34 = arith.constant 0 : index
      %c0_35 = arith.constant 0 : index
      %61 = vector.load %arg9[%c0_34, %c0_35] : memref<1x16xf32, #tpu.memory_space<vmem>>, vector<1x16xf32>
      tpu.vector_store %arg9[%c0_34, %c0_35], %60 {strides = array<i32>} : memref<1x16xf32, #tpu.memory_space<vmem>>, vector<1x16xf32>,
      %cst_36 = arith.constant 0.000000e+00 : f32
      %62 = vector.broadcast %cst_36 : f32 to vector<1x16xf32>
      %c0_37 = arith.constant 0 : index
      %c0_38 = arith.constant 0 : index
      %63 = vector.load %arg10[%c0_37, %c0_38] : memref<1x16xf32, #tpu.memory_space<vmem>>, vector<1x16xf32>
      tpu.vector_store %arg10[%c0_37, %c0_38], %62 {strides = array<i32>} : memref<1x16xf32, #tpu.memory_space<vmem>>, vector<1x16xf32>,
      %c0_39 = arith.constant 0 : index
      %c0_40 = arith.constant 0 : index
      %64 = vector.load %arg3[%c0_39, %c0_40] : memref<16x32xf32, #tpu.memory_space<vmem>>, vector<16x32xf32>
      %65 = arith.mulf %64, %64 : vector<16x32xf32>
      %cst_41 = arith.constant dense<0.000000e+00> : vector<16xf32>
      %66 = vector.multi_reduction <add>, %65, %cst_41 [1] : vector<16x32xf32> to vector<16xf32>
      %67 = vector.shape_cast %66 : vector<16xf32> to vector<16x1xf32>
      %cst_42 = arith.constant 1.000000e-24 : f32
      %68 = vector.broadcast %cst_42 : f32 to vector<16x1xf32>
      %69 = arith.maximumf %67, %68 : vector<16x1xf32>
      %70 = math.rsqrt %69 : vector<16x1xf32>
      %71 = vector.broadcast %70 : vector<16x1xf32> to vector<16x32xf32>
      %72 = arith.mulf %64, %71 : vector<16x32xf32>
      %73 = arith.truncf %72 : vector<16x32xf32> to vector<16x32xbf16>
      %c0_43 = arith.constant 0 : index
      %c0_44 = arith.constant 0 : index
      %74 = vector.load %arg11[%c0_43, %c0_44] : memref<16x32xbf16, #tpu.memory_space<vmem>>, vector<16x32xbf16>
      tpu.vector_store %arg11[%c0_43, %c0_44], %73 {strides = array<i32>} : memref<16x32xbf16, #tpu.memory_space<vmem>>, vector<16x32xbf16>,
    } else {
    }
    %c0 = arith.constant 0 : index
    %c0_1 = arith.constant 0 : index
    %3 = vector.load %arg2[%c0, %c0_1] : memref<8x32xf32, #tpu.memory_space<vmem>>, vector<8x32xf32>
    %4 = arith.mulf %3, %3 : vector<8x32xf32>
    %cst = arith.constant dense<0.000000e+00> : vector<8xf32>
    %5 = vector.multi_reduction <add>, %4, %cst [1] : vector<8x32xf32> to vector<8xf32>
    %6 = vector.shape_cast %5 : vector<8xf32> to vector<8x1xf32>
    %cst_2 = arith.constant 1.000000e-24 : f32
    %7 = vector.broadcast %cst_2 : f32 to vector<8x1xf32>
    %8 = arith.maximumf %6, %7 : vector<8x1xf32>
    %9 = math.rsqrt %8 : vector<8x1xf32>
    %10 = vector.broadcast %9 : vector<8x1xf32> to vector<8x32xf32>
    %11 = arith.mulf %3, %10 : vector<8x32xf32>
    %12 = arith.truncf %11 : vector<8x32xf32> to vector<8x32xbf16>
    %c0_3 = arith.constant 0 : index
    %c0_4 = arith.constant 0 : index
    %13 = vector.load %arg11[%c0_3, %c0_4] : memref<16x32xbf16, #tpu.memory_space<vmem>>, vector<16x32xbf16>
    %cst_5 = arith.constant dense<0.000000e+00> : vector<8x16xf32>
    %14 = tpu.matmul %12, %13, %cst_5 {dimension_numbers = #tpu.dot_dimension_numbers<[1], [1], [0], [0], [0, 0, 1, 0], [], []>} : vector<8x32xbf16>, vector<16x32xbf16>, vector<8x16xf32> -> vector<8x16xf32>
    %c16_i32 = arith.constant 16 : i32
    %15 = arith.muli %arg0, %c16_i32 : i32
    %16 = tpu.iota {dimensions = array<i32: 1>} : vector<8x16xi32>
    %17 = vector.broadcast %15 : i32 to vector<8x16xi32>
    %18 = arith.addi %17, %16 : vector<8x16xi32>
    %c0_6 = arith.constant 0 : index
    %c0_7 = arith.constant 0 : index
    %19 = vector.load %arg4[%c0_6, %c0_7] : memref<8x1xi32, #tpu.memory_space<vmem>>, vector<8x1xi32>
    %20 = vector.broadcast %19 : vector<8x1xi32> to vector<8x16xi32>
    %21 = arith.cmpi eq, %18, %20 : vector<8x16xi32>
    %22 = arith.extui %21 : vector<8x16xi1> to vector<8x16xi32>
    %23 = arith.sitofp %22 : vector<8x16xi32> to vector<8x16xf32>
    %cst_8 = arith.constant 3.200000e+01 : f32
    %24 = vector.broadcast %cst_8 : f32 to vector<8x16xf32>
    %25 = arith.mulf %24, %14 : vector<8x16xf32>
    %26 = math.exp %25 : vector<8x16xf32>
    %c0_9 = arith.constant 0 : index
    %c0_10 = arith.constant 0 : index
    %27 = vector.load %arg9[%c0_9, %c0_10] : memref<1x16xf32, #tpu.memory_space<vmem>>, vector<1x16xf32>
    %cst_11 = arith.constant 1.000000e+00 : f32
    %28 = vector.broadcast %cst_11 : f32 to vector<8x16xf32>
    %29 = arith.subf %28, %23 : vector<8x16xf32>
    %30 = arith.mulf %29, %26 : vector<8x16xf32>
    %cst_12 = arith.constant dense<0.000000e+00> : vector<16xf32>
    %31 = vector.multi_reduction <add>, %30, %cst_12 [0] : vector<8x16xf32> to vector<16xf32>
    %32 = vector.shape_cast %31 : vector<16xf32> to vector<1x16xf32>
    %33 = arith.addf %27, %32 : vector<1x16xf32>
    %c0_13 = arith.constant 0 : index
    %c0_14 = arith.constant 0 : index
    %34 = vector.load %arg9[%c0_13, %c0_14] : memref<1x16xf32, #tpu.memory_space<vmem>>, vector<1x16xf32>
    tpu.vector_store %arg9[%c0_13, %c0_14], %33 {strides = array<i32>} : memref<1x16xf32, #tpu.memory_space<vmem>>, vector<1x16xf32>,
    %35 = arith.mulf %23, %14 : vector<8x16xf32>
    %cst_15 = arith.constant dense<0.000000e+00> : vector<8xf32>
    %36 = vector.multi_reduction <add>, %35, %cst_15 [1] : vector<8x16xf32> to vector<8xf32>
    %37 = vector.shape_cast %36 : vector<8xf32> to vector<8x1xf32>
    %cst_16 = arith.constant 1.000000e-01 : f32
    %38 = vector.broadcast %cst_16 : f32 to vector<8x1xf32>
    %39 = arith.subf %37, %38 : vector<8x1xf32>
    %cst_17 = arith.constant -3.200000e+01 : f32
    %40 = vector.broadcast %cst_17 : f32 to vector<8x1xf32>
    %41 = arith.mulf %40, %39 : vector<8x1xf32>
    %42 = math.exp %41 : vector<8x1xf32>
    %c0_18 = arith.constant 0 : index
    %c0_19 = arith.constant 0 : index
    %43 = vector.load %arg8[%c0_18, %c0_19] : memref<1x16xf32, #tpu.memory_space<vmem>>, vector<1x16xf32>
    %44 = vector.broadcast %42 : vector<8x1xf32> to vector<8x16xf32>
    %45 = arith.mulf %23, %44 : vector<8x16xf32>
    %cst_20 = arith.constant dense<0.000000e+00> : vector<16xf32>
    %46 = vector.multi_reduction <add>, %45, %cst_20 [0] : vector<8x16xf32> to vector<16xf32>
    %47 = vector.shape_cast %46 : vector<16xf32> to vector<1x16xf32>
    %48 = arith.addf %43, %47 : vector<1x16xf32>
    %c0_21 = arith.constant 0 : index
    %c0_22 = arith.constant 0 : index
    %49 = vector.load %arg8[%c0_21, %c0_22] : memref<1x16xf32, #tpu.memory_space<vmem>>, vector<1x16xf32>
    tpu.vector_store %arg8[%c0_21, %c0_22], %48 {strides = array<i32>} : memref<1x16xf32, #tpu.memory_space<vmem>>, vector<1x16xf32>,
    %c0_23 = arith.constant 0 : index
    %c0_24 = arith.constant 0 : index
    %50 = vector.load %arg10[%c0_23, %c0_24] : memref<1x16xf32, #tpu.memory_space<vmem>>, vector<1x16xf32>
    %cst_25 = arith.constant dense<0.000000e+00> : vector<16xf32>
    %51 = vector.multi_reduction <add>, %23, %cst_25 [0] : vector<8x16xf32> to vector<16xf32>
    %52 = vector.shape_cast %51 : vector<16xf32> to vector<1x16xf32>
    %53 = arith.addf %50, %52 : vector<1x16xf32>
    %c0_26 = arith.constant 0 : index
    %c0_27 = arith.constant 0 : index
    %54 = vector.load %arg10[%c0_26, %c0_27] : memref<1x16xf32, #tpu.memory_space<vmem>>, vector<1x16xf32>
    tpu.vector_store %arg10[%c0_26, %c0_27], %53 {strides = array<i32>} : memref<1x16xf32, #tpu.memory_space<vmem>>, vector<1x16xf32>,
    %c0_i32_28 = arith.constant 0 : i32
    %55 = arith.cmpi eq, %arg1, %c0_i32_28 : i32
    %56 = arith.extui %55 : i1 to i32
    %c0_i32_29 = arith.constant 0 : i32
    %57 = arith.cmpi ne, %56, %c0_i32_29 : i32
    scf.if %57 {
      %c0_30 = arith.constant 0 : index
      %c0_31 = arith.constant 0 : index
      %58 = vector.load %arg8[%c0_30, %c0_31] : memref<1x16xf32, #tpu.memory_space<vmem>>, vector<1x16xf32>
      %59 = math.log1p %58 : vector<1x16xf32>
      %c0_32 = arith.constant 0 : index
      %c0_33 = arith.constant 0 : index
      %60 = vector.load %arg5[%c0_32, %c0_33] : memref<1x16xf32, #tpu.memory_space<vmem>>, vector<1x16xf32>
      tpu.vector_store %arg5[%c0_32, %c0_33], %59 {strides = array<i32>} : memref<1x16xf32, #tpu.memory_space<vmem>>, vector<1x16xf32>,
      %c0_34 = arith.constant 0 : index
      %c0_35 = arith.constant 0 : index
      %61 = vector.load %arg9[%c0_34, %c0_35] : memref<1x16xf32, #tpu.memory_space<vmem>>, vector<1x16xf32>
      %cst_36 = arith.constant 24.5325298 : f32
      %62 = vector.broadcast %cst_36 : f32 to vector<1x16xf32>
      %63 = arith.mulf %62, %61 : vector<1x16xf32>
      %64 = math.log1p %63 : vector<1x16xf32>
      %c0_37 = arith.constant 0 : index
      %c0_38 = arith.constant 0 : index
      %65 = vector.load %arg6[%c0_37, %c0_38] : memref<1x16xf32, #tpu.memory_space<vmem>>, vector<1x16xf32>
      tpu.vector_store %arg6[%c0_37, %c0_38], %64 {strides = array<i32>} : memref<1x16xf32, #tpu.memory_space<vmem>>, vector<1x16xf32>,
      %c0_39 = arith.constant 0 : index
      %c0_40 = arith.constant 0 : index
      %66 = vector.load %arg10[%c0_39, %c0_40] : memref<1x16xf32, #tpu.memory_space<vmem>>, vector<1x16xf32>
      %cst_41 = arith.constant 0.000000e+00 : f32
      %67 = vector.broadcast %cst_41 : f32 to vector<1x16xf32>
      %68 = arith.cmpf ogt, %66, %67 : vector<1x16xf32>
      %69 = arith.extui %68 : vector<1x16xi1> to vector<1x16xi32>
      %70 = arith.sitofp %69 : vector<1x16xi32> to vector<1x16xf32>
      %c0_42 = arith.constant 0 : index
      %c0_43 = arith.constant 0 : index
      %71 = vector.load %arg7[%c0_42, %c0_43] : memref<1x16xf32, #tpu.memory_space<vmem>>, vector<1x16xf32>
      tpu.vector_store %arg7[%c0_42, %c0_43], %70 {strides = array<i32>} : memref<1x16xf32, #tpu.memory_space<vmem>>, vector<1x16xf32>,
    } else {
    }
    return
  }
  func.func @transform_0(%arg0: i32, %arg1: i32) -> (i32, i32) {
    %c0_i32 = arith.constant 0 : i32
    %c0_i32_0 = arith.constant 0 : i32
    return %arg1, %c0_i32 : i32, i32
  }
  func.func @transform_1(%arg0: i32, %arg1: i32) -> (i32, i32) {
    %c0_i32 = arith.constant 0 : i32
    %c0_i32_0 = arith.constant 0 : i32
    return %arg0, %c0_i32 : i32, i32
  }
  func.func @transform_2(%arg0: i32, %arg1: i32) -> (i32, i32) {
    %c0_i32 = arith.constant 0 : i32
    %c0_i32_0 = arith.constant 0 : i32
    return %arg1, %c0_i32 : i32, i32
  }
  func.func @transform_3(%arg0: i32, %arg1: i32) -> (i32, i32) {
    %c0_i32 = arith.constant 0 : i32
    %c0_i32_0 = arith.constant 0 : i32
    return %c0_i32, %arg0 : i32, i32
  }
  func.func @transform_4(%arg0: i32, %arg1: i32) -> (i32, i32) {
    %c0_i32 = arith.constant 0 : i32
    %c0_i32_0 = arith.constant 0 : i32
    return %c0_i32, %arg0 : i32, i32
  }
  func.func @transform_5(%arg0: i32, %arg1: i32) -> (i32, i32) {
    %c0_i32 = arith.constant 0 : i32
    %c0_i32_0 = arith.constant 0 : i32
    return %c0_i32, %arg0 : i32, i32
  }
}

</mosaic_0001>

<llo_original>
// kernel: tpu_custom_call.1
$region0: #{tpu_custom_call.1}
  #allocation0 [shape = 'u32[]', space=smem, size = 0x4, offset = 0x4, fixed_abs, tag = 'smem constant byte address 0x4 - core index']
  #allocation1 [shape = 'u32[144,128]{1,0:T(1,128)}', space=vmem, size = 0x12000, scoped, tag = 'internal scratch']
  #allocation2 [shape = 'f32[1,16]{1,0:T(1,128)}', space=vmem, size = 0x200, scoped, tag = 'scratch operand']
  #allocation3 [shape = 'f32[1,16]{1,0:T(1,128)}', space=vmem, size = 0x200, scoped, tag = 'scratch operand']
  #allocation4 [shape = 'f32[1,16]{1,0:T(1,128)}', space=vmem, size = 0x200, scoped, tag = 'scratch operand']
  #allocation5 [shape = 'bf16[16,32]{1,0:T(8,128)(2,1)}', space=vmem, size = 0x1000, scoped, tag = 'scratch operand']
  %s0 = inlined_call_operand.vmem [shape: f32[8,32], index: 0, kind: input, shape index: {}]
  %s1 = inlined_call_operand.hbm [shape: f32[16,32], index: 1, kind: input, shape index: {}]
  %s2 = inlined_call_operand.vmem [shape: s32[8,1], index: 2, kind: input, shape index: {}]
  %s3 = inlined_call_operand.hbm [shape: f32[1,16], index: 3, kind: output, shape index: {0}]
  %s4 = inlined_call_operand.hbm [shape: f32[1,16], index: 4, kind: output, shape index: {1}]
  %s5 = inlined_call_operand.hbm [shape: f32[1,16], index: 5, kind: output, shape index: {2}]
  %6 = xla_tuple %s3, %s4, %s5
  %s7 = sld [smem:[#allocation0]]
  $region50: #{tpu_custom_call.1} parent=0
    _
  %s9 = ssub.s32 1, %s7
  %s10 = scalar_select 0, %s9, %s7
  $region1: #{tpu_custom_call.1} parent=0
    #allocation6 [shape = 'u8[8192]{0}', space=vmem, size = 0x2000, scoped, tag = 'input window, operand 1, single buffered']
    #allocation7 [shape = 's32[1]{0}', space=sflag, size = 0x4, scoped, tag = 'scoped memory for tpu_custom_call.1']
    #allocation8 [shape = 's32[1]{0}', space=sflag, size = 0x4, scoped, tag = 'scoped memory for tpu_custom_call.1']
    #allocation9 [shape = 'u8[512]{0}', space=vmem, size = 0x400, scoped, tag = 'output window, operand 0, single buffered']
    #allocation10 [shape = 'u8[512]{0}', space=vmem, size = 0x400, scoped, tag = 'output window, operand 1, single buffered']
    #allocation11 [shape = 's32[1]{0}', space=sflag, size = 0x4, scoped, tag = 'scoped memory for tpu_custom_call.1']
    #allocation12 [shape = 'u8[512]{0}', space=vmem, size = 0x400, scoped, tag = 'output window, operand 2, single buffered']
    %11 = vsyncpa [#allocation7], 0
    %12 = vsyncpa [#allocation8], 0
    %13 = vsyncpa [#allocation11], 0
    // Predicated region
    $region2: #{tpu_custom_call.1} parent=1 // pred_check
      _
    $region3: #{tpu_custom_call.1} parent=1 // pred_check_branch
      %15 = sbr.rel (0) target = $region5
    $region4: #{tpu_custom_call.1} parent=1 // pred_region
      _
    $region5: #{tpu_custom_call.1} parent=1 // pred_fallthru
      _
    // Predicated region
    $region6: #{tpu_custom_call.1} parent=1 // pred_check
      _
    $region7: #{tpu_custom_call.1} parent=1 // pred_check_branch
      %17 = sbr.rel (0) target = $region9
    $region8: #{tpu_custom_call.1} parent=1 // pred_region
      %s19 = ssub.s32 256, 256
      %20 = vsyncadd [#allocation7], %s19
      %s21 = sshll.u32 [#allocation6], 4
      %s22 = int_to_ptr.vmem [resolvable:$true] %s21
      %27 = dma.hbm_to_vmem [thread:$0]  %s1, 256, %s22, [#allocation7], 128, 128, 8
    $region9: #{tpu_custom_call.1} parent=1 // pred_fallthru
      _
    // Predicated region
    $region10: #{tpu_custom_call.1} parent=1 // pred_check
      _
    $region11: #{tpu_custom_call.1} parent=1 // pred_check_branch
      %29 = sbr.rel (0) target = $region13
    $region12: #{tpu_custom_call.1} parent=1 // pred_region
      _
    $region13: #{tpu_custom_call.1} parent=1 // pred_fallthru
      _
    // Predicated region
    $region14: #{tpu_custom_call.1} parent=1 // pred_check
      _
    $region15: #{tpu_custom_call.1} parent=1 // pred_check_branch
      %31 = sbr.rel (0) target = $region17
    $region16: #{tpu_custom_call.1} parent=1 // pred_region
      %32 = dma.done [#allocation7], 256
    $region17: #{tpu_custom_call.1} parent=1 // pred_fallthru
      _
    %p34 = scmp.eq.s32.totalorder 0, 0
    // Predicated region
    $region18: #{tpu_custom_call.1} parent=1 // pred_check
      %p35 = pneg %p34
    $region19: #{tpu_custom_call.1} parent=1 // pred_check_branch
      %37 = sbr.rel (%p35) target = $region21
    $region20: #{tpu_custom_call.1} parent=1 // pred_region
      %vm38 = vcmask 122880
      %39 = vst.msk [vmem:[#allocation2] sm:$0x1] %vm38, 0.0
      %40 = vst.msk [vmem:[#allocation3] sm:$0x1] %vm38, 0.0
      %41 = vst.msk [vmem:[#allocation4] sm:$0x1] %vm38, 0.0
      %v42 = vld [vmem:[#allocation6] sm:$0xff]
      %v43 = vld [vmem:[#allocation6 + $0x8] sm:$0xff]
      %v44 = vmul.f32 %v42, %v42
      %v45 = vmul.f32 %v43, %v43
      %vm46 = vcmask 261120
      %v47 = vsel %vm46, %v44, 0.0
      %48 = vadd.xlane.f32.xlu0 %v47
      %v49 = vpop.xlane.xlu0 %48
      %v50 = vsel %vm46, %v45, 0.0
      %51 = vadd.xlane.f32.xlu0 %v50
      %v52 = vpop.xlane.xlu0 %51
      %v53 = vmax.f32 %v49, 1e-24
      %v54 = vmax.f32 %v52, 1e-24
      %v55 = vrsqrt.pop %v53
      %v56 = vrsqrt.pop %v54
      %v57 = vmul.f32 %v42, %v55
      %v58 = vmul.f32 %v43, %v56
      %v59 = vpack.c.bf16 %v58, %v57
      %v61 = vunpack.c.l.b16 %v59
      %v62 = vunpack.c.h.b16 %v59
      %v63 = vpack.c.b16 %v61, %v61
      %v64 = vpack.c.b16 %v62, %v62
      %vm67 = vcmask 257024
      %68 = vst.msk [vmem:[#allocation5] sm:$0xf] %vm67, %v63
      %69 = vst.msk [vmem:[#allocation5 + $0x4] sm:$0xf] %vm67, %v64
    $region21: #{tpu_custom_call.1} parent=1 // pred_fallthru
      _
    %v70 = vld [vmem:[%s0] sm:$0xff]
    %v71 = vmul.f32 %v70, %v70
    %vm72 = vcmask 261120
    %v73 = vsel %vm72, %v71, 0.0
    %74 = vadd.xlane.f32.xlu0 %v73
    %v75 = vpop.xlane.xlu0 %74
    %v76 = vmax.f32 %v75, 1e-24
    %v77 = vrsqrt.pop %v76
    %v78 = vmul.f32 %v70, %v77
    %v79 = vpack.c.bf16 %v78, %v78
    %v80 = vld [vmem:[#allocation5] sm:$0xf]
    %v81 = vld [vmem:[#allocation5 + $0x4] sm:$0xf]
    %v84 = vunpack.c.l.b16 %v80
    %v85 = vunpack.c.l.b16 %v81
    %v86 = vpack.c.b16 %v85, %v84
    %v88 = vsel %vm72, %v79, 0
    %v91 = vsel %vm72, %v86, 0
    %93 = vmatprep.subr.bf16.mxu0 0
    %94 = vmatpush1.bf16.xpose.msra.mxu0 0
    %95 = vmatprep.subr.bf16.mxu0 0
    %96 = vmatpush1.bf16.xpose.msra.mxu0 0
    %97 = vmatprep.subr.bf16.mxu0 0
    %98 = vmatpush1.bf16.xpose.msra.mxu0 0
    %99 = vmatprep.subr.bf16.mxu0 0
    %100 = vmatpush1.bf16.xpose.msra.mxu0 0
    %101 = vmatprep.subr.bf16.mxu0 0
    %102 = vmatpush1.bf16.xpose.msra.mxu0 0
    %103 = vmatprep.subr.bf16.mxu0 0
    %104 = vmatpush1.bf16.xpose.msra.mxu0 0
    %105 = vmatprep.subr.bf16.mxu0 0
    %106 = vmatpush1.bf16.xpose.msra.mxu0 0
    %107 = vmatprep.subr.bf16.mxu0 0
    %108 = vmatpush1.bf16.xpose.msra.mxu0 %v91
    %109 = vmatprep.subr.bf16.mxu0 0
    %110 = vmatpush2.bf16.xpose.msra.mxu0 0
    %111 = vmatprep.subr.bf16.mxu0 0
    %112 = vmatpush2.bf16.xpose.msra.mxu0 0
    %113 = vmatprep.subr.bf16.mxu0 0
    %114 = vmatpush2.bf16.xpose.msra.mxu0 0
    %115 = vmatprep.subr.bf16.mxu0 0
    %116 = vmatpush2.bf16.xpose.msra.mxu0 0
    %117 = vmatprep.subr.bf16.mxu0 0
    %118 = vmatpush2.bf16.xpose.msra.mxu0 0
    %119 = vmatprep.subr.bf16.mxu0 0
    %120 = vmatpush2.bf16.xpose.msra.mxu0 0
    %121 = vmatprep.subr.bf16.mxu0 0
    %122 = vmatpush2.bf16.xpose.msra.mxu0 0
    %123 = vmatprep.subr.bf16.mxu0 0
    %124 = vmatpush2.bf16.xpose.msra.mxu0 0
    %125 = vmatprep.mubr.bf16.mxu0 0
    %126 = vmatmul.mubr.bf16.gmra.mxu0 %v88
    %v127 = vpop.f32.mrf.mxu0
    %v128 = vadd.f32 0.0, %v127
    %v129 = vpop.f32.mrf.mxu0
    %v130 = vpop.f32.mrf.mxu0
    %v131 = vpop.f32.mrf.mxu0
    %132 = vdwg.mxu0
    %s133 = smul.u32 0, 16
    %v134 = vlaneseq
    %v135 = vand.u32 %v134, 127
    %v136 = vstv %s133
    %v137 = vadd.s32 %v136, %v135
    %v138 = vld [vmem:[%s2] sm:$0xff]
    %139 = vset.pattern.permute.xlu0 0
    %140 = vperm.xlu0 %139, %v138
    %v141 = vpop.permute.xlu0 %140
    %vm142 = vcmp.eq.s32.totalorder %v137, %v141
    %v143 = vsel %vm142, 1, 0
    %v144 = vcvt.s32.f32 %v143
    %v145 = vmul.f32 %v128, 32.0
    %v146 = vmul.f32 %v145, 1.442695
    %v147 = vpow.pop %v146
    %v148 = vld [vmem:[#allocation3] sm:$0x1]
    %v149 = vsub.f32 1.0, %v144
    %v150 = vmul.f32 %v149, %v147
    %vm151 = vcmask 130048
    %v152 = vsel %vm151, %v150, 0.0
    %v153 = vrot.slane %v152, 4
    %v154 = vadd.f32 %v152, %v153
    %v155 = vrot.slane %v154, 2
    %v156 = vadd.f32 %v154, %v155
    %v157 = vrot.slane %v156, 1
    %v158 = vadd.f32 %v156, %v157
    %v159 = vadd.f32 %v148, %v158
    %vm160 = vcmask 122880
    %161 = vst.msk [vmem:[#allocation3] sm:$0x1] %vm160, %v159
    %v162 = vmul.f32 %v144, %v128
    %v163 = vsel %vm151, %v162, 0.0
    %164 = vadd.xlane.f32.xlu0 %v163
    %v165 = vpop.xlane.xlu0 %164
    %v166 = vsub.f32 %v165, 0.1
    %v167 = vmul.f32 %v166, -32.0
    %v168 = vmul.f32 %v167, 1.442695
    %v169 = vpow.pop %v168
    %v170 = vld [vmem:[#allocation2] sm:$0x1]
    %v171 = vmul.f32 %v144, %v169
    %v172 = vsel %vm151, %v171, 0.0
    %v173 = vrot.slane %v172, 4
    %v174 = vadd.f32 %v172, %v173
    %v175 = vrot.slane %v174, 2
    %v176 = vadd.f32 %v174, %v175
    %v177 = vrot.slane %v176, 1
    %v178 = vadd.f32 %v176, %v177
    %v179 = vadd.f32 %v170, %v178
    %180 = vst.msk [vmem:[#allocation2] sm:$0x1] %vm160, %v179
    %v181 = vld [vmem:[#allocation4] sm:$0x1]
    %v182 = vsel %vm151, %v144, 0.0
    %v183 = vrot.slane %v182, 4
    %v184 = vadd.f32 %v182, %v183
    %v185 = vrot.slane %v184, 2
    %v186 = vadd.f32 %v184, %v185
    %v187 = vrot.slane %v186, 1
    %v188 = vadd.f32 %v186, %v187
    %v189 = vadd.f32 %v181, %v188
    %190 = vst.msk [vmem:[#allocation4] sm:$0x1] %vm160, %v189
    // Predicated region
    $region22: #{tpu_custom_call.1} parent=1 // pred_check
      %p191 = pneg %p34
    $region23: #{tpu_custom_call.1} parent=1 // pred_check_branch
      %193 = sbr.rel (%p191) target = $region25
    $region24: #{tpu_custom_call.1} parent=1 // pred_region
      %v194 = vld [vmem:[#allocation2] sm:$0x1]
      %v195 = vadd.f32 %v194, 1.0
      %v196 = vlog2.pop %v195
      %v197 = vmul.f32 %v196, 0.6931472
      %v198 = vmul.f32 -0.5, %v194
      %v199 = vadd.f32 %v198, 1.0
      %v200 = vmul.f32 %v199, %v194
      %v201 = vand.u32 2147483647, %v194
      %vm202 = vcmp.lt.f32.partialorder %v201, 0.0004427343
      %v203 = vsel %vm202, %v200, %v197
      %204 = vst.msk [vmem:[#allocation9] sm:$0x1] %vm160, %v203
      %v205 = vld [vmem:[#allocation3] sm:$0x1]
      %v206 = vmul.f32 %v205, 24.53253
      %v207 = vadd.f32 %v206, 1.0
      %v208 = vlog2.pop %v207
      %v209 = vmul.f32 %v208, 0.6931472
      %v210 = vmul.f32 -0.5, %v206
      %v211 = vadd.f32 %v210, 1.0
      %v212 = vmul.f32 %v211, %v206
      %v213 = vand.u32 2147483647, %v206
      %vm214 = vcmp.lt.f32.partialorder %v213, 0.0004427343
      %v215 = vsel %vm214, %v212, %v209
      %216 = vst.msk [vmem:[#allocation10] sm:$0x1] %vm160, %v215
      %v217 = vld [vmem:[#allocation4] sm:$0x1]
      %vm218 = vcmp.gt.f32.partialorder %v217, 0.0
      %v219 = vsel %vm218, 1, 0
      %v220 = vcvt.s32.f32 %v219
      %221 = vst.msk [vmem:[#allocation12] sm:$0x1] %vm160, %v220
    $region25: #{tpu_custom_call.1} parent=1 // pred_fallthru
      _
    // Predicated region
    $region26: #{tpu_custom_call.1} parent=1 // pred_check
      _
    $region27: #{tpu_custom_call.1} parent=1 // pred_check_branch
      %223 = sbr.rel (0) target = $region29
    $region28: #{tpu_custom_call.1} parent=1 // pred_region
      %s225 = ssub.s32 16, 16
      %226 = vsyncadd [#allocation8], %s225
      %s228 = sshll.u32 [#allocation9], 4
      %s229 = int_to_ptr.vmem [resolvable:$true] %s228
      %231 = dma.vmem_to_hbm [thread:$0]  %s229, 16, %s3, [#allocation8]
    $region29: #{tpu_custom_call.1} parent=1 // pred_fallthru
      _
    // Predicated region
    $region30: #{tpu_custom_call.1} parent=1 // pred_check
      _
    $region31: #{tpu_custom_call.1} parent=1 // pred_check_branch
      %233 = sbr.rel (0) target = $region33
    $region32: #{tpu_custom_call.1} parent=1 // pred_region
      %s235 = ssub.s32 16, 16
      %236 = vsyncadd [#allocation11], %s235
      %s238 = sshll.u32 [#allocation10], 4
      %s239 = int_to_ptr.vmem [resolvable:$true] %s238
      %241 = dma.vmem_to_hbm [thread:$0]  %s239, 16, %s4, [#allocation11]
    $region33: #{tpu_custom_call.1} parent=1 // pred_fallthru
      _
    // Predicated region
    $region34: #{tpu_custom_call.1} parent=1 // pred_check
      _
    $region35: #{tpu_custom_call.1} parent=1 // pred_check_branch
      %243 = sbr.rel (0) target = $region37
    $region36: #{tpu_custom_call.1} parent=1 // pred_region
      %s245 = ssub.s32 16, 16
      %246 = vsyncadd [#allocation11], %s245
      %s248 = sshll.u32 [#allocation12], 4
      %s249 = int_to_ptr.vmem [resolvable:$true] %s248
      %251 = dma.vmem_to_hbm [thread:$0]  %s249, 16, %s5, [#allocation11]
    $region37: #{tpu_custom_call.1} parent=1 // pred_fallthru
      _
    // Predicated region
    $region38: #{tpu_custom_call.1} parent=1 // pred_check
      _
    $region39: #{tpu_custom_call.1} parent=1 // pred_check_branch
      %253 = sbr.rel (0) target = $region41
    $region40: #{tpu_custom_call.1} parent=1 // pred_region
      %254 = dma.done [#allocation8], 16
    $region41: #{tpu_custom_call.1} parent=1 // pred_fallthru
      _
    // Predicated region
    $region42: #{tpu_custom_call.1} parent=1 // pred_check
      _
    $region43: #{tpu_custom_call.1} parent=1 // pred_check_branch
      %256 = sbr.rel (0) target = $region45
    $region44: #{tpu_custom_call.1} parent=1 // pred_region
      %257 = dma.done [#allocation11], 16
    $region45: #{tpu_custom_call.1} parent=1 // pred_fallthru
      _
    // Predicated region
    $region46: #{tpu_custom_call.1} parent=1 // pred_check
      _
    $region47: #{tpu_custom_call.1} parent=1 // pred_check_branch
      %259 = sbr.rel (0) target = $region49
    $region48: #{tpu_custom_call.1} parent=1 // pred_region
      %260 = dma.done [#allocation11], 16
    $region49: #{tpu_custom_call.1} parent=1 // pred_fallthru
      _
    %261 = vsyncpa [#allocation7], 1
    %262 = vsyncpa [#allocation8], 1
    %263 = vsyncpa [#allocation11], 1

</llo_original>
